<compile_context>
chip_gen: v7x
topology: tpu7x:2x2x1
jax: 0.10.0
libtpu: 0.0.40
codegen_flags: <defaults>
</compile_context>

<pallas_src>
import functools

import jax
import jax.numpy as jnp
from jax.experimental import pallas as pl
from jax.experimental.pallas import tpu as pltpu


def _round_up(x, m):
    return (x + m - 1) // m * m


def policy_kernel(x_ref, wc_ref, bc_ref, wl_ref, bl_ref, out_ref, *, valid_p):
    """Fused: 1x1 conv (BN folded) -> ReLU -> Linear -> log_softmax, all in VMEM.

    Shapes (HWp / Pp are 128-padded):
      x_ref : (C, N*HWp)    activations, channels on sublanes, (sample, space) on lanes
      wc_ref: (2, C)        BN-folded conv weight
      bc_ref: (2, 1)        BN-folded conv bias (f32), broadcast in-register
      wl_ref: (2*HWp, Pp)   linear weight, c-major flatten order, zero-padded
      bl_ref: (1, Pp)       linear bias (f32), zero-padded
      out   : (N, Pp)       log-probabilities (padded columns hold a large negative)
    """
    n_batch, p_pad = out_ref.shape
    hwp = wl_ref.shape[0] // 2

    # 1x1 conv over the whole batch: a single MXU matmul, f32 accumulation.
    z = jnp.dot(wc_ref[...], x_ref[...], preferred_element_type=jnp.float32)  # (2, N*HWp)
    z = jnp.maximum(z + bc_ref[...], 0.0)  # BN shift + ReLU; (2,1) bias broadcast is free on VPU

    # Re-pack to the c-major flattened layout the Linear expects: one (N, 2*HWp) slab.
    # Static lane slices + concats only (pure data movement, no matmuls, no reshapes).
    rows = []
    for n in range(n_batch):  # small static unroll over batch; each row is (1, 2*HWp)
        lo, hi = n * hwp, (n + 1) * hwp
        rows.append(jnp.concatenate([z[0:1, lo:hi], z[1:2, lo:hi]], axis=1))
    act = jnp.concatenate(rows, axis=0)                                       # (N, 2*HWp), f32

    # Linear: one (N, 2*HWp) @ (2*HWp, Pp) MXU matmul; bf16 inputs allowed, f32 accumulate.
    y = jnp.dot(act.astype(wl_ref.dtype), wl_ref[...],
                preferred_element_type=jnp.float32) + bl_ref[...]             # (N, Pp), f32

    # Mask the padded logit columns so they cannot corrupt the softmax normalizer.
    col = jax.lax.broadcasted_iota(jnp.int32, (n_batch, p_pad), 1)
    y = jnp.where(col < valid_p, y, jnp.float32(-1e30))

    # Numerically stable log_softmax along dim 1 (single batched epilogue).
    m = jnp.max(y, axis=1, keepdims=True)
    s = y - m
    lse = jnp.log(jnp.sum(jnp.exp(s), axis=1, keepdims=True))
    out_ref[...] = s - lse                                                    # one dense store


def prepare_params(params, board_length, eps=1e-5, compute_dtype=jnp.float32):
    """One-time parameter folding / padding / layout prep (hoisted out of the forward pass).

    compute_dtype=jnp.bfloat16 feeds bf16 into the MXU (recommended on v6e/v7x); accumulation
    and the epilogue stay f32 inside the kernel, so it is also safe on v5e.
    """
    conv_w, conv_b, bn_gamma, bn_beta, bn_mean, bn_var, lin_w, lin_b = params
    HW = board_length ** 2
    P = HW + 1
    HWp = _round_up(HW, 128)
    Pp = _round_up(P, 128)

    # Fold eval-mode BatchNorm into the 1x1 conv.
    # TODO(synk): BatchNorm2d uses eval/inference semantics (running stats); PyTorch train-mode
    #             batch statistics are not reproduced.
    scale = bn_gamma / jnp.sqrt(bn_var + eps)                       # (2,)
    wc = (conv_w * scale[:, None]).astype(compute_dtype)            # (2, C)
    bc = (scale * (conv_b - bn_mean) + bn_beta).reshape(2, 1).astype(jnp.float32)

    # Linear weight: per-conv-channel slabs (c-major flatten order), zero-padded HW->HWp, P->Pp,
    # then stacked into a single (2*HWp, Pp) weight.
    lin_w_r = jnp.transpose(lin_w.reshape(P, 2, HW), (1, 2, 0))     # (2, HW, P)
    wl = jnp.zeros((2, HWp, Pp), jnp.float32).at[:, :HW, :P].set(lin_w_r)
    wl = wl.reshape(2 * HWp, Pp).astype(compute_dtype)
    bl = jnp.zeros((1, Pp), jnp.float32).at[0, :P].set(lin_b)

    return dict(wc=wc, bc=bc, wl=wl, bl=bl, HW=HW, HWp=HWp, P=P, Pp=Pp)


def policy_net_forward(x_nchw, prep):
    """Per-call wrapper: lane-pad + layout the activations, run the fused kernel, slice output."""
    N, C, H, W = x_nchw.shape
    HW, HWp, P, Pp = prep["HW"], prep["HWp"], prep["P"], prep["Pp"]
    compute_dtype = prep["wc"].dtype

    # (N, C, HW) -> zero-pad spatial lanes to HWp -> (C, N*HWp) with channels on sublanes.
    x = x_nchw.reshape(N, C, HW).astype(compute_dtype)
    x = jnp.pad(x, ((0, 0), (0, 0), (0, HWp - HW)))
    x2 = jnp.transpose(x, (1, 0, 2)).reshape(C, N * HWp)

    out_padded = pl.pallas_call(
        functools.partial(policy_kernel, valid_p=P),
        out_shape=jax.ShapeDtypeStruct((N, Pp), jnp.float32),
        grid=(1,),
        in_specs=[
            pl.BlockSpec((C, N * HWp), lambda i: (0, 0)),
            pl.BlockSpec((2, C), lambda i: (0, 0)),
            pl.BlockSpec((2, 1), lambda i: (0, 0)),
            pl.BlockSpec((2 * HWp, Pp), lambda i: (0, 0)),
            pl.BlockSpec((1, Pp), lambda i: (0, 0)),
        ],
        out_specs=pl.BlockSpec((N, Pp), lambda i: (0, 0)),
        compiler_params=pltpu.CompilerParams(dimension_semantics=("arbitrary",)),
    )(x2, prep["wc"], prep["bc"], prep["wl"], prep["bl"])

    return out_padded[:, :P]


def policy_net_reference(x_nchw, params, eps=1e-5):
    """Pure-JAX reference mirroring the PyTorch forward (eval-mode BN)."""
    conv_w, conv_b, bn_gamma, bn_beta, bn_mean, bn_var, lin_w, lin_b = params
    N = x_nchw.shape[0]
    z = jnp.einsum('oc,nchw->nohw', conv_w, x_nchw) + conv_b[None, :, None, None]
    z = (bn_gamma[None, :, None, None] * (z - bn_mean[None, :, None, None])
         / jnp.sqrt(bn_var + eps)[None, :, None, None]) + bn_beta[None, :, None, None]
    z = jnp.maximum(z, 0.0)
    y = z.reshape(N, -1) @ lin_w.T + lin_b[None, :]
    return jax.nn.log_softmax(y, axis=1)


def make_params(key, in_features, board_length):
    """Deterministic synthetic parameters matching PolicyNet.__init__ shapes."""
    P = board_length ** 2 + 1
    HW = board_length ** 2
    ks = jax.random.split(key, 8)
    conv_w = 0.1 * jax.random.normal(ks[0], (2, in_features), jnp.float32)      # Conv2d(in,2,1) weight
    conv_b = 0.1 * jax.random.normal(ks[1], (2,), jnp.float32)                  # Conv2d bias
    bn_gamma = 1.0 + 0.1 * jax.random.normal(ks[2], (2,), jnp.float32)          # BatchNorm2d weight
    bn_beta = 0.1 * jax.random.normal(ks[3], (2,), jnp.float32)                 # BatchNorm2d bias
    bn_mean = 0.1 * jax.random.normal(ks[4], (2,), jnp.float32)                 # running_mean
    bn_var = 1.0 + 0.1 * jnp.abs(jax.random.normal(ks[5], (2,), jnp.float32))   # running_var
    lin_w = 0.05 * jax.random.normal(ks[6], (P, 2 * HW), jnp.float32)           # Linear weight
    lin_b = 0.05 * jax.random.normal(ks[7], (P,), jnp.float32)                  # Linear bias
    return (conv_w, conv_b, bn_gamma, bn_beta, bn_mean, bn_var, lin_w, lin_b)


if __name__ == "__main__":
    batch = 2
    in_features = 8      # small, stands in for the default 128
    board_length = 9     # default board size -> 9x9 spatial, output dim 82

    key = jax.random.PRNGKey(0)
    k_x, k_p = jax.random.split(key)
    x = jax.random.normal(k_x, (batch, in_features, board_length, board_length), jnp.float32)
    params = make_params(k_p, in_features, board_length)

    ref = policy_net_reference(x, params)

    # f32 path (matches the PyTorch module's numerics).
    prep_f32 = prepare_params(params, board_length, compute_dtype=jnp.float32)
    out_f32 = jax.block_until_ready(policy_net_forward(x, prep_f32))
    assert out_f32.shape == (batch, board_length ** 2 + 1)
    assert jnp.allclose(out_f32, ref, atol=1e-4, rtol=1e-4), (
        f"f32 max abs diff {jnp.max(jnp.abs(out_f32 - ref))}")

    # bf16 MXU-input path (v6e/v7x perf option; f32 accumulation + f32 epilogue).
    prep_bf16 = prepare_params(params, board_length, compute_dtype=jnp.bfloat16)
    out_bf16 = jax.block_until_ready(policy_net_forward(x, prep_bf16))
    assert out_bf16.shape == (batch, board_length ** 2 + 1)
    assert bool(jnp.all(jnp.isfinite(out_bf16)))
    assert float(jnp.max(jnp.abs(out_bf16 - ref))) < 0.1, (
        f"bf16 max abs diff {jnp.max(jnp.abs(out_bf16 - ref))}")

    print("KERNEL_OK")
</pallas_src>

<mosaic_0001>
module attributes {stable_mosaic.version = 11 : i64} {
  func.func @policy_kernel(%arg0: i32, %arg1: memref<8x256xf32, #tpu.memory_space<vmem>>, %arg2: memref<2x8xf32, #tpu.memory_space<vmem>>, %arg3: memref<2x1xf32, #tpu.memory_space<vmem>>, %arg4: memref<256x128xf32, #tpu.memory_space<vmem>>, %arg5: memref<1x128xf32, #tpu.memory_space<vmem>>, %arg6: memref<2x128xf32, #tpu.memory_space<vmem>>) attributes {dimension_semantics = [#tpu.dimension_semantics<arbitrary>], iteration_bounds = array<i64: 1>, scalar_prefetch = 0 : i64, scratch_operands = 0 : i64, tpu.core_type = #tpu.core_type<tc>, window_params = [{pipeline_mode = #tpu.pipeline_mode<synchronous>, transform_indices = @transform_0, window_bounds = array<i64: 8, 256>}, {pipeline_mode = #tpu.pipeline_mode<synchronous>, transform_indices = @transform_1, window_bounds = array<i64: 2, 8>}, {pipeline_mode = #tpu.pipeline_mode<synchronous>, transform_indices = @transform_2, window_bounds = array<i64: 2, 1>}, {pipeline_mode = #tpu.pipeline_mode<synchronous>, transform_indices = @transform_3, window_bounds = array<i64: 256, 128>}, {pipeline_mode = #tpu.pipeline_mode<synchronous>, transform_indices = @transform_4, window_bounds = array<i64: 1, 128>}, {pipeline_mode = #tpu.pipeline_mode<synchronous>, transform_indices = @transform_5, window_bounds = array<i64: 2, 128>}]} {
    %c0 = arith.constant 0 : index
    %c0_0 = arith.constant 0 : index
    %0 = vector.load %arg2[%c0, %c0_0] : memref<2x8xf32, #tpu.memory_space<vmem>>, vector<2x8xf32>
    %c0_1 = arith.constant 0 : index
    %c0_2 = arith.constant 0 : index
    %1 = vector.load %arg1[%c0_1, %c0_2] : memref<8x256xf32, #tpu.memory_space<vmem>>, vector<8x256xf32>
    %cst = arith.constant dense<0.000000e+00> : vector<2x256xf32>
    %2 = tpu.matmul %0, %1, %cst {dimension_numbers = #tpu.dot_dimension_numbers<[1], [0], [0], [1], [0, 0, 1, 1], [], []>} : vector<2x8xf32>, vector<8x256xf32>, vector<2x256xf32> -> vector<2x256xf32>
    %c0_3 = arith.constant 0 : index
    %c0_4 = arith.constant 0 : index
    %3 = vector.load %arg3[%c0_3, %c0_4] : memref<2x1xf32, #tpu.memory_space<vmem>>, vector<2x1xf32>
    %4 = vector.broadcast %3 : vector<2x1xf32> to vector<2x256xf32>
    %5 = arith.addf %2, %4 : vector<2x256xf32>
    %cst_5 = arith.constant 0.000000e+00 : f32
    %6 = vector.broadcast %cst_5 : f32 to vector<2x256xf32>
    %7 = arith.maximumf %5, %6 : vector<2x256xf32>
    %8 = vector.extract_strided_slice %7 {offsets = [0, 0], sizes = [1, 128], strides = [1, 1]} : vector<2x256xf32> to vector<1x128xf32>
    %9 = vector.extract_strided_slice %7 {offsets = [1, 0], sizes = [1, 128], strides = [1, 1]} : vector<2x256xf32> to vector<1x128xf32>
    %10 = tpu.concatenate %8, %9 in 1 : vector<1x128xf32>, vector<1x128xf32> -> vector<1x256xf32>
    %11 = vector.extract_strided_slice %7 {offsets = [0, 128], sizes = [1, 128], strides = [1, 1]} : vector<2x256xf32> to vector<1x128xf32>
    %12 = vector.extract_strided_slice %7 {offsets = [1, 128], sizes = [1, 128], strides = [1, 1]} : vector<2x256xf32> to vector<1x128xf32>
    %13 = tpu.concatenate %11, %12 in 1 : vector<1x128xf32>, vector<1x128xf32> -> vector<1x256xf32>
    %14 = tpu.concatenate %10, %13 in 0 : vector<1x256xf32>, vector<1x256xf32> -> vector<2x256xf32>
    %c0_6 = arith.constant 0 : index
    %c0_7 = arith.constant 0 : index
    %15 = vector.load %arg4[%c0_6, %c0_7] : memref<256x128xf32, #tpu.memory_space<vmem>>, vector<256x128xf32>
    %cst_8 = arith.constant dense<0.000000e+00> : vector<2x128xf32>
    %16 = tpu.matmul %14, %15, %cst_8 {dimension_numbers = #tpu.dot_dimension_numbers<[1], [0], [0], [1], [0, 0, 1, 1], [], []>} : vector<2x256xf32>, vector<256x128xf32>, vector<2x128xf32> -> vector<2x128xf32>
    %c0_9 = arith.constant 0 : index
    %c0_10 = arith.constant 0 : index
    %17 = vector.load %arg5[%c0_9, %c0_10] : memref<1x128xf32, #tpu.memory_space<vmem>>, vector<1x128xf32>
    %18 = vector.broadcast %17 : vector<1x128xf32> to vector<2x128xf32>
    %19 = arith.addf %16, %18 : vector<2x128xf32>
    %20 = tpu.iota {dimensions = array<i32: 1>} : vector<2x128xi32>
    %c82_i32 = arith.constant 82 : i32
    %21 = vector.broadcast %c82_i32 : i32 to vector<2x128xi32>
    %22 = arith.cmpi slt, %20, %21 : vector<2x128xi32>
    %cst_11 = arith.constant -1.000000e+30 : f32
    %23 = vector.broadcast %cst_11 : f32 to vector<2x128xf32>
    %24 = arith.select %22, %19, %23 : vector<2x128xi1>, vector<2x128xf32>
    %cst_12 = arith.constant dense<0xFF800000> : vector<2xf32>
    %25 = vector.multi_reduction <maximumf>, %24, %cst_12 [1] : vector<2x128xf32> to vector<2xf32>
    %26 = vector.shape_cast %25 : vector<2xf32> to vector<2x1xf32>
    %27 = vector.broadcast %26 : vector<2x1xf32> to vector<2x128xf32>
    %28 = arith.subf %24, %27 : vector<2x128xf32>
    %29 = math.exp %28 : vector<2x128xf32>
    %cst_13 = arith.constant dense<0.000000e+00> : vector<2xf32>
    %30 = vector.multi_reduction <add>, %29, %cst_13 [1] : vector<2x128xf32> to vector<2xf32>
    %31 = vector.shape_cast %30 : vector<2xf32> to vector<2x1xf32>
    %32 = math.log %31 : vector<2x1xf32>
    %33 = vector.broadcast %32 : vector<2x1xf32> to vector<2x128xf32>
    %34 = arith.subf %28, %33 : vector<2x128xf32>
    %c0_14 = arith.constant 0 : index
    %c0_15 = arith.constant 0 : index
    %35 = vector.load %arg6[%c0_14, %c0_15] : memref<2x128xf32, #tpu.memory_space<vmem>>, vector<2x128xf32>
    tpu.vector_store %arg6[%c0_14, %c0_15], %34 {strides = array<i32>} : memref<2x128xf32, #tpu.memory_space<vmem>>, vector<2x128xf32>,
    return
  }
  func.func @transform_0(%arg0: i32) -> (i32, i32) {
    %c0_i32 = arith.constant 0 : i32
    %c0_i32_0 = arith.constant 0 : i32
    %c0_i32_1 = arith.constant 0 : i32
    return %c0_i32, %c0_i32_0 : i32, i32
  }
  func.func @transform_1(%arg0: i32) -> (i32, i32) {
    %c0_i32 = arith.constant 0 : i32
    %c0_i32_0 = arith.constant 0 : i32
    %c0_i32_1 = arith.constant 0 : i32
    return %c0_i32, %c0_i32_0 : i32, i32
  }
  func.func @transform_2(%arg0: i32) -> (i32, i32) {
    %c0_i32 = arith.constant 0 : i32
    %c0_i32_0 = arith.constant 0 : i32
    %c0_i32_1 = arith.constant 0 : i32
    return %c0_i32, %c0_i32_0 : i32, i32
  }
  func.func @transform_3(%arg0: i32) -> (i32, i32) {
    %c0_i32 = arith.constant 0 : i32
    %c0_i32_0 = arith.constant 0 : i32
    %c0_i32_1 = arith.constant 0 : i32
    return %c0_i32, %c0_i32_0 : i32, i32
  }
  func.func @transform_4(%arg0: i32) -> (i32, i32) {
    %c0_i32 = arith.constant 0 : i32
    %c0_i32_0 = arith.constant 0 : i32
    %c0_i32_1 = arith.constant 0 : i32
    return %c0_i32, %c0_i32_0 : i32, i32
  }
  func.func @transform_5(%arg0: i32) -> (i32, i32) {
    %c0_i32 = arith.constant 0 : i32
    %c0_i32_0 = arith.constant 0 : i32
    %c0_i32_1 = arith.constant 0 : i32
    return %c0_i32, %c0_i32_0 : i32, i32
  }
}

</mosaic_0001>

<llo_original>
// kernel: tpu_custom_call.1
$region0: #{tpu_custom_call.1}
  #allocation0 [shape = 'u32[]', space=smem, size = 0x4, offset = 0x4, fixed_abs, tag = 'smem constant byte address 0x4 - core index']
  #allocation1 [shape = 'u32[144,128]{1,0:T(1,128)}', space=vmem, size = 0x12000, scoped, tag = 'internal scratch']
  %s0 = inlined_call_operand.hbm [shape: f32[8,256], index: 0, kind: input, shape index: {}]
  %s1 = inlined_call_operand.vmem [shape: f32[2,8], index: 1, kind: input, shape index: {}]
  %s2 = inlined_call_operand.vmem [shape: f32[2,1], index: 2, kind: input, shape index: {}]
  %s3 = inlined_call_operand.hbm [shape: f32[256,128], index: 3, kind: input, shape index: {}]
  %s4 = inlined_call_operand.vmem [shape: f32[1,128], index: 4, kind: input, shape index: {}]
  %s5 = inlined_call_operand.hbm [shape: f32[2,128], index: 5, kind: output, shape index: {}]
  %s6 = sld [smem:[#allocation0]]
  $region38: #{tpu_custom_call.1} parent=0
    _
  %s8 = ssub.s32 1, %s6
  %s9 = scalar_select 0, %s8, %s6
  $region1: #{tpu_custom_call.1} parent=0
    #allocation2 [shape = 'u8[8192]{0}', space=vmem, size = 0x2000, scoped, tag = 'input window, operand 0, single buffered']
    #allocation3 [shape = 's32[1]{0}', space=sflag, size = 0x4, scoped, tag = 'scoped memory for tpu_custom_call.1']
    #allocation4 [shape = 's32[1]{0}', space=sflag, size = 0x4, scoped, tag = 'scoped memory for tpu_custom_call.1']
    #allocation5 [shape = 'u8[131072]{0}', space=vmem, size = 0x20000, scoped, tag = 'input window, operand 3, single buffered']
    #allocation6 [shape = 's32[1]{0}', space=sflag, size = 0x4, scoped, tag = 'scoped memory for tpu_custom_call.1']
    #allocation7 [shape = 'u8[1024]{0}', space=vmem, size = 0x400, scoped, tag = 'output window, operand 0, single buffered']
    %10 = vsyncpa [#allocation3], 0
    %11 = vsyncpa [#allocation6], 0
    %12 = vsyncpa [#allocation4], 0
    // Predicated region
    $region2: #{tpu_custom_call.1} parent=1 // pred_check
      _
    $region3: #{tpu_custom_call.1} parent=1 // pred_check_branch
      %14 = sbr.rel (0) target = $region5
    $region4: #{tpu_custom_call.1} parent=1 // pred_region
      %s16 = ssub.s32 256, 256
      %17 = vsyncadd [#allocation3], %s16
      %s19 = sshll.u32 [#allocation2], 4
      %s20 = int_to_ptr.vmem [resolvable:$true] %s19
      %22 = dma.hbm_to_vmem [thread:$0]  %s0, 256, %s20, [#allocation3]
    $region5: #{tpu_custom_call.1} parent=1 // pred_fallthru
      _
    // Predicated region
    $region6: #{tpu_custom_call.1} parent=1 // pred_check
      _
    $region7: #{tpu_custom_call.1} parent=1 // pred_check_branch
      %24 = sbr.rel (0) target = $region9
    $region8: #{tpu_custom_call.1} parent=1 // pred_region
      _
    $region9: #{tpu_custom_call.1} parent=1 // pred_fallthru
      _
    // Predicated region
    $region10: #{tpu_custom_call.1} parent=1 // pred_check
      _
    $region11: #{tpu_custom_call.1} parent=1 // pred_check_branch
      %26 = sbr.rel (0) target = $region13
    $region12: #{tpu_custom_call.1} parent=1 // pred_region
      _
    $region13: #{tpu_custom_call.1} parent=1 // pred_fallthru
      _
    // Predicated region
    $region14: #{tpu_custom_call.1} parent=1 // pred_check
      _
    $region15: #{tpu_custom_call.1} parent=1 // pred_check_branch
      %28 = sbr.rel (0) target = $region17
    $region16: #{tpu_custom_call.1} parent=1 // pred_region
      %s30 = ssub.s32 4096, 4096
      %31 = vsyncadd [#allocation6], %s30
      %s32 = sshll.u32 [#allocation5], 4
      %s33 = int_to_ptr.vmem [resolvable:$true] %s32
      %38 = dma.hbm_to_vmem [thread:$0]  %s3, 4096, %s33, [#allocation6], 128, 128, 8
    $region17: #{tpu_custom_call.1} parent=1 // pred_fallthru
      _
    // Predicated region
    $region18: #{tpu_custom_call.1} parent=1 // pred_check
      _
    $region19: #{tpu_custom_call.1} parent=1 // pred_check_branch
      %40 = sbr.rel (0) target = $region21
    $region20: #{tpu_custom_call.1} parent=1 // pred_region
      _
    $region21: #{tpu_custom_call.1} parent=1 // pred_fallthru
      _
    // Predicated region
    $region22: #{tpu_custom_call.1} parent=1 // pred_check
      _
    $region23: #{tpu_custom_call.1} parent=1 // pred_check_branch
      %42 = sbr.rel (0) target = $region25
    $region24: #{tpu_custom_call.1} parent=1 // pred_region
      %43 = dma.done [#allocation3], 256
    $region25: #{tpu_custom_call.1} parent=1 // pred_fallthru
      _
    // Predicated region
    $region26: #{tpu_custom_call.1} parent=1 // pred_check
      _
    $region27: #{tpu_custom_call.1} parent=1 // pred_check_branch
      %45 = sbr.rel (0) target = $region29
    $region28: #{tpu_custom_call.1} parent=1 // pred_region
      %46 = dma.done [#allocation6], 4096
    $region29: #{tpu_custom_call.1} parent=1 // pred_fallthru
      _
    %v47 = vld [vmem:[%s1] sm:$0x3]
    %v48 = vld [vmem:[#allocation2] sm:$0xff]
    %v49 = vld [vmem:[#allocation2 + $0x8] sm:$0xff]
    %v50 = vld [vmem:[%s2] sm:$0x3]
    %52 = vset.pattern.permute.xlu0 0
    %53 = vperm.xlu0 %52, %v50
    %v54 = vpop.permute.xlu0 %53
    %vm56 = vcmask 64512
    %v58 = vsel %vm56, %v47, 0
    %60 = vmatprep.subr.mxu0 %v49
    %61 = vmatpush1.msra.mxu0 %v48
    %62 = vmatprep.subr.mxu0 0.0
    %63 = vmatpush1.msra.mxu0 0.0
    %64 = vmatprep.subr.mxu0 0.0
    %65 = vmatpush1.msra.mxu0 0.0
    %66 = vmatprep.subr.mxu0 0.0
    %67 = vmatpush1.msra.mxu0 0.0
    %68 = vmatprep.subr.mxu0 0.0
    %69 = vmatpush1.msra.mxu0 0.0
    %70 = vmatprep.subr.mxu0 0.0
    %71 = vmatpush1.msra.mxu0 0.0
    %72 = vmatprep.subr.mxu0 0.0
    %73 = vmatpush1.msra.mxu0 0.0
    %74 = vmatprep.subr.mxu0 0.0
    %75 = vmatpush1.msra.mxu0 0.0
    %76 = vmatprep.subr.mxu0 0.0
    %77 = vmatpush1.msra.mxu0 0.0
    %78 = vmatprep.subr.mxu0 0.0
    %79 = vmatpush1.msra.mxu0 0.0
    %80 = vmatprep.subr.mxu0 0.0
    %81 = vmatpush1.msra.mxu0 0.0
    %82 = vmatprep.subr.mxu0 0.0
    %83 = vmatpush1.msra.mxu0 0.0
    %84 = vmatprep.subr.mxu0 0.0
    %85 = vmatpush1.msra.mxu0 0.0
    %86 = vmatprep.subr.mxu0 0.0
    %87 = vmatpush1.msra.mxu0 0.0
    %88 = vmatprep.subr.mxu0 0.0
    %89 = vmatpush1.msra.mxu0 0.0
    %90 = vmatprep.subr.mxu0 0.0
    %91 = vmatpush1.msra.mxu0 0.0
    %92 = vmatprep.subr.mxu0 0.0
    %93 = vmatpush1.msra.mxu0 0.0
    %94 = vmatprep.subr.mxu0 0.0
    %95 = vmatpush1.msra.mxu0 0.0
    %96 = vmatprep.subr.mxu0 0.0
    %97 = vmatpush1.msra.mxu0 0.0
    %98 = vmatprep.subr.mxu0 0.0
    %99 = vmatpush1.msra.mxu0 0.0
    %100 = vmatprep.subr.mxu0 0.0
    %101 = vmatpush1.msra.mxu0 0.0
    %102 = vmatprep.subr.mxu0 0.0
    %103 = vmatpush1.msra.mxu0 0.0
    %104 = vmatprep.subr.mxu0 0.0
    %105 = vmatpush1.msra.mxu0 0.0
    %106 = vmatprep.subr.mxu0 0.0
    %107 = vmatpush1.msra.mxu0 0.0
    %108 = vmatprep.subr.mxu0 0.0
    %109 = vmatpush1.msra.mxu0 0.0
    %110 = vmatprep.subr.mxu0 0.0
    %111 = vmatpush1.msra.mxu0 0.0
    %112 = vmatprep.subr.mxu0 0.0
    %113 = vmatpush1.msra.mxu0 0.0
    %114 = vmatprep.subr.mxu0 0.0
    %115 = vmatpush1.msra.mxu0 0.0
    %116 = vmatprep.subr.mxu0 0.0
    %117 = vmatpush1.msra.mxu0 0.0
    %118 = vmatprep.subr.mxu0 0.0
    %119 = vmatpush1.msra.mxu0 0.0
    %120 = vmatprep.subr.mxu0 0.0
    %121 = vmatpush1.msra.mxu0 0.0
    %122 = vmatprep.subr.mxu0 0.0
    %123 = vmatpush1.msra.mxu0 0.0
    %124 = vmatprep.mubr.f32.mxu0 0.0
    %125 = vmatmul.mubr.f32.gmra.mrb[0].mxu0 %v58
    %v126 = vpop.f32.mrb[0].mxu0
    %v127 = vadd.f32 %v54, %v126
    %v128 = vpop.f32.mrb[0].mxu0
    %v129 = vadd.f32 %v54, %v128
    %130 = vdwg.mxu0
    %v131 = vmax.f32 %v127, 0.0
    %v132 = vmax.f32 %v129, 0.0
    %v134 = vrot.slane %v131, 1
    %v137 = vrot.slane %v132, 1
    %v138 = vrot.slane %v132, 7
    %v139 = vrot.slane %v137, 7
    %vm142 = vcmask 1040384
    %v143 = vsel %vm142, %v131, %v138
    %v144 = vsel %vm142, %v134, %v139
    %v145 = vld [vmem:[#allocation5] sm:$0xff]
    %v146 = vld [vmem:[#allocation5 + $0x8] sm:$0xff]
    %v147 = vld [vmem:[#allocation5 + $0x10] sm:$0xff]
    %v148 = vld [vmem:[#allocation5 + $0x18] sm:$0xff]
    %v149 = vld [vmem:[#allocation5 + $0x20] sm:$0xff]
    %v150 = vld [vmem:[#allocation5 + $0x28] sm:$0xff]
    %v151 = vld [vmem:[#allocation5 + $0x30] sm:$0xff]
    %v152 = vld [vmem:[#allocation5 + $0x38] sm:$0xff]
    %v153 = vld [vmem:[#allocation5 + $0x40] sm:$0xff]
    %v154 = vld [vmem:[#allocation5 + $0x48] sm:$0xff]
    %v155 = vld [vmem:[#allocation5 + $0x50] sm:$0xff]
    %v156 = vld [vmem:[#allocation5 + $0x58] sm:$0xff]
    %v157 = vld [vmem:[#allocation5 + $0x60] sm:$0xff]
    %v158 = vld [vmem:[#allocation5 + $0x68] sm:$0xff]
    %v159 = vld [vmem:[#allocation5 + $0x70] sm:$0xff]
    %v160 = vld [vmem:[#allocation5 + $0x78] sm:$0xff]
    %v161 = vld [vmem:[#allocation5 + $0x80] sm:$0xff]
    %v162 = vld [vmem:[#allocation5 + $0x88] sm:$0xff]
    %v163 = vld [vmem:[#allocation5 + $0x90] sm:$0xff]
    %v164 = vld [vmem:[#allocation5 + $0x98] sm:$0xff]
    %v165 = vld [vmem:[#allocation5 + $0xa0] sm:$0xff]
    %v166 = vld [vmem:[#allocation5 + $0xa8] sm:$0xff]
    %v167 = vld [vmem:[#allocation5 + $0xb0] sm:$0xff]
    %v168 = vld [vmem:[#allocation5 + $0xb8] sm:$0xff]
    %v169 = vld [vmem:[#allocation5 + $0xc0] sm:$0xff]
    %v170 = vld [vmem:[#allocation5 + $0xc8] sm:$0xff]
    %v171 = vld [vmem:[#allocation5 + $0xd0] sm:$0xff]
    %v172 = vld [vmem:[#allocation5 + $0xd8] sm:$0xff]
    %v173 = vld [vmem:[#allocation5 + $0xe0] sm:$0xff]
    %v174 = vld [vmem:[#allocation5 + $0xe8] sm:$0xff]
    %v175 = vld [vmem:[#allocation5 + $0xf0] sm:$0xff]
    %v176 = vld [vmem:[#allocation5 + $0xf8] sm:$0xff]
    %v177 = vld [vmem:[%s4] sm:$0x1]
    %v179 = vlaneseq
    %v180 = vshrl.u32 %v179, 7
    %v181 = vsub.s32 0, %v180
    %v182 = vrot.slane %v177, %v181
    %184 = vmatprep.subr.mxu0 0.0
    %185 = vmatpush1.msra.mxu0 %v145
    %186 = vmatprep.subr.mxu0 0.0
    %187 = vmatpush1.msra.mxu0 %v146
    %188 = vmatprep.subr.mxu0 0.0
    %189 = vmatpush1.msra.mxu0 %v147
    %190 = vmatprep.subr.mxu0 0.0
    %191 = vmatpush1.msra.mxu0 %v148
    %192 = vmatprep.subr.mxu0 0.0
    %193 = vmatpush1.msra.mxu0 %v149
    %194 = vmatprep.subr.mxu0 0.0
    %195 = vmatpush1.msra.mxu0 %v150
    %196 = vmatprep.subr.mxu0 0.0
    %197 = vmatpush1.msra.mxu0 %v151
    %198 = vmatprep.subr.mxu0 0.0
    %199 = vmatpush1.msra.mxu0 %v152
    %200 = vmatprep.subr.mxu0 0.0
    %201 = vmatpush1.msra.mxu0 %v153
    %202 = vmatprep.subr.mxu0 0.0
    %203 = vmatpush1.msra.mxu0 %v154
    %204 = vmatprep.subr.mxu0 0.0
    %205 = vmatpush1.msra.mxu0 %v155
    %206 = vmatprep.subr.mxu0 0.0
    %207 = vmatpush1.msra.mxu0 %v156
    %208 = vmatprep.subr.mxu0 0.0
    %209 = vmatpush1.msra.mxu0 %v157
    %210 = vmatprep.subr.mxu0 0.0
    %211 = vmatpush1.msra.mxu0 %v158
    %212 = vmatprep.subr.mxu0 0.0
    %213 = vmatpush1.msra.mxu0 %v159
    %214 = vmatprep.subr.mxu0 0.0
    %215 = vmatpush1.msra.mxu0 %v160
    %216 = vmatprep.subr.mxu0 0.0
    %217 = vmatpush1.msra.mxu0 %v161
    %218 = vmatprep.subr.mxu0 0.0
    %219 = vmatpush1.msra.mxu0 %v162
    %220 = vmatprep.subr.mxu0 0.0
    %221 = vmatpush1.msra.mxu0 %v163
    %222 = vmatprep.subr.mxu0 0.0
    %223 = vmatpush1.msra.mxu0 %v164
    %224 = vmatprep.subr.mxu0 0.0
    %225 = vmatpush1.msra.mxu0 %v165
    %226 = vmatprep.subr.mxu0 0.0
    %227 = vmatpush1.msra.mxu0 %v166
    %228 = vmatprep.subr.mxu0 0.0
    %229 = vmatpush1.msra.mxu0 %v167
    %230 = vmatprep.subr.mxu0 0.0
    %231 = vmatpush1.msra.mxu0 %v168
    %232 = vmatprep.subr.mxu0 0.0
    %233 = vmatpush1.msra.mxu0 %v169
    %234 = vmatprep.subr.mxu0 0.0
    %235 = vmatpush1.msra.mxu0 %v170
    %236 = vmatprep.subr.mxu0 0.0
    %237 = vmatpush1.msra.mxu0 %v171
    %238 = vmatprep.subr.mxu0 0.0
    %239 = vmatpush1.msra.mxu0 %v172
    %240 = vmatprep.subr.mxu0 0.0
    %241 = vmatpush1.msra.mxu0 %v173
    %242 = vmatprep.subr.mxu0 0.0
    %243 = vmatpush1.msra.mxu0 %v174
    %244 = vmatprep.subr.mxu0 0.0
    %245 = vmatpush1.msra.mxu0 %v175
    %246 = vmatprep.subr.mxu0 0.0
    %247 = vmatpush1.msra.mxu0 %v176
    %248 = vmatprep.mubr.f32.mxu0 %v144
    %249 = vmatmul.mubr.f32.gmra.mrb[0].mxu0 %v143
    %v250 = vpop.f32.mrb[0].mxu0
    %v251 = vadd.f32 %v182, %v250
    %v252 = vpop.f32.mrb[0].mxu0
    %253 = vdwg.mxu0
    %v254 = vlaneseq
    %v255 = vand.u32 %v254, 127
    %vm256 = vcmp.lt.s32.totalorder %v255, 82
    %v257 = vsel %vm256, %v251, -1e+30
    %vm258 = vcmask 1041408
    %v259 = vsel %vm258, %v257, -inf
    %260 = vmax.xlane.f32.xlu0 %v259
    %v261 = vpop.xlane.xlu0 %260
    %v262 = vsub.f32 %v257, %v261
    %v263 = vmul.f32 %v262, 1.442695
    %v264 = vpow.pop %v263
    %v265 = vsel %vm258, %v264, 0.0
    %266 = vadd.xlane.f32.xlu0 %v265
    %v267 = vpop.xlane.xlu0 %266
    %v268 = vlog2.pop %v267
    %v269 = vmul.f32 %v268, 0.6931472
    %v270 = vsub.f32 %v262, %v269
    %271 = vst [vmem:[#allocation7] sm:$0x3] %v270
    // Predicated region
    $region30: #{tpu_custom_call.1} parent=1 // pred_check
      _
    $region31: #{tpu_custom_call.1} parent=1 // pred_check_branch
      %273 = sbr.rel (0) target = $region33
    $region32: #{tpu_custom_call.1} parent=1 // pred_region
      %s275 = ssub.s32 32, 32
      %276 = vsyncadd [#allocation4], %s275
      %s278 = sshll.u32 [#allocation7], 4
      %s279 = int_to_ptr.vmem [resolvable:$true] %s278
      %281 = dma.vmem_to_hbm [thread:$0]  %s279, 32, %s5, [#allocation4]
    $region33: #{tpu_custom_call.1} parent=1 // pred_fallthru
      _
    // Predicated region
    $region34: #{tpu_custom_call.1} parent=1 // pred_check
      _
    $region35: #{tpu_custom_call.1} parent=1 // pred_check_branch
      %283 = sbr.rel (0) target = $region37
    $region36: #{tpu_custom_call.1} parent=1 // pred_region
      %284 = dma.done [#allocation4], 32
    $region37: #{tpu_custom_call.1} parent=1 // pred_fallthru
      _
    %285 = vsyncpa [#allocation3], 1
    %286 = vsyncpa [#allocation6], 1
    %287 = vsyncpa [#allocation4], 1

</llo_original>
